<compile_context>
chip_gen: v7x
topology: tpu7x:2x2x1
jax: 0.10.0
libtpu: 0.0.40
codegen_flags: <defaults>
</compile_context>

<pallas_src>
import functools

import jax
import jax.numpy as jnp
from jax import lax
from jax.experimental import pallas as pl
from jax.experimental.pallas import tpu as pltpu


def _round_up(x, m):
    return (x + m - 1) // m * m


def _cdiv(a, b):
    return -(-a // b)


# ----------------------------- Pallas kernel ------------------------------ #
def _gated_convt_phase_kernel(x_ref, w_ref, b_ref, o_ref, *, Ci, Co, P, offs,
                              activation=None):
    """One (image-row-block, output-phase) tile of the gated ConvTranspose2d.

    x_ref : (1, Ci, P_in)     flattened padded input rows (+halo), bf16/f32
    w_ref : (1, T, 2*Co, Ci)  this phase's taps, h||g fused on the out-channel axis
    b_ref : (2*Co, 1)         f32 biases (bh || bg)
    o_ref : (1, 1, Co, P)     gated output block, pixels on the lane axis
    """
    x = x_ref[0]                                          # (Ci, P_in)
    acc = None
    # Static, fully unrolled tap loop; each tap is a lane-dense (2Co, P) dot
    # result accumulated in registers (no VMEM accumulator, no zero-init).
    # TODO(synk): for tiny Ci, concatenating the T slices into one (T*Ci, P)
    # RHS would fold the taps into a single deeper MXU contraction.
    for t, off in enumerate(offs):
        z = jnp.dot(w_ref[0, t], x[:, off:off + P],
                    preferred_element_type=jnp.float32)   # (2*Co, P) f32
        acc = z if acc is None else acc + z
    hg = acc + b_ref[...]                                 # bias, lane-broadcast
    h = hg[:Co, :]
    g = hg[Co:, :]
    if activation is not None:                            # module default: None
        h = activation(h)
    o_ref[0, 0] = h * jax.nn.sigmoid(g)


# ------------------------------- wrapper ---------------------------------- #
def gated_conv_transpose2d(x_nchw, wh, bh, wg, bg, stride, padding=0,
                           dilation=1, *, activation=None,
                           compute_dtype=jnp.bfloat16, row_tile=None):
    """ConvTranspose2d(h) * sigmoid(ConvTranspose2d(g)), PyTorch semantics.

    x_nchw : (N, Ci, H, W) float32
    wh, wg : (Ci, Co, K, K)  PyTorch ConvTranspose2d weight layout
    bh, bg : (Co,)
    returns: (N, Co, Ho, Wo) float32
    """
    N, Ci, H, W = x_nchw.shape
    _, Co, K, _ = wh.shape
    s, p, d = int(stride), int(padding), int(dilation)

    Ho = (H - 1) * s - 2 * p + d * (K - 1) + 1
    Wo = (W - 1) * s - 2 * p + d * (K - 1) + 1
    assert Ho >= 1 and Wo >= 1, "empty ConvTranspose2d output"
    pe = d * (K - 1) - p                       # may be negative; handled below

    # ---- polyphase tap table (superset of per-phase offsets) ---------------
    # Output pixel (qy*s+py, qx*s+px) reads original input (qy+ry, qx+rx) with
    # ry = (py + kh*d - pe)/s for the kh (index into the flipped kernel) that
    # makes this an integer.  Phases that miss a given (ry, rx) get zero taps.
    roff = sorted({(ph + k * d - pe) // s
                   for ph in range(s) for k in range(K)
                   if (ph + k * d - pe) % s == 0})
    pad_t = max(0, -roff[0])                   # zero-pad so offsets are >= 0
    roffp = [r + pad_t for r in roff]
    Tax = len(roff)
    T = Tax * Tax
    max_off_ax = roffp[-1]

    Qy, Qx = _cdiv(Ho, s), _cdiv(Wo, s)        # per-phase output extent
    W_in = _round_up(max(Qx + max_off_ax, W + pad_t), 8)
    off_max = max_off_ax * W_in + max_off_ax
    itemsize = jnp.dtype(compute_dtype).itemsize

    # ---- generation-aware row tiling (P = th*W_in is a multiple of 128) -----
    try:
        vmem_cap = int(pltpu.get_tpu_info().vmem_capacity_bytes)
    except Exception:                          # interpret mode / older runtime
        vmem_cap = 64 * 2**20                  # assume the smallest (v7x) VMEM
    step_budget = max(2 * 2**20, min(vmem_cap // 4, 40 * 2**20))

    def _step_bytes(th_):
        P_ = th_ * W_in
        P_in_ = _round_up(P_ + off_max, 128)
        xb = _round_up(Ci, 8) * P_in_ * itemsize
        wb = T * _round_up(2 * Co, 8) * 128 * itemsize
        ob = _round_up(Co, 8) * P_ * 4
        bb = _round_up(2 * Co, 8) * 128 * 4
        return 2 * (xb + wb + ob + bb)         # double-buffered pipeline

    th_cap = _round_up(Qy, 16)
    if N * s * s == 1 and Qy > 16:
        # keep >= 2 grid steps so both v7x TensorCores get work
        th_cap = max(16, _round_up(_cdiv(Qy, 2), 16))
    th = th_cap if row_tile is None else max(16, min(th_cap,
                                                     _round_up(row_tile, 16)))
    while th > 16 and _step_bytes(th) > step_budget:
        th -= 16

    n_hb = _cdiv(Qy, th)
    P = th * W_in
    P_in = _round_up(P + off_max, 128)
    Hp = max(H + pad_t, _cdiv((n_hb - 1) * th * W_in + P_in, W_in))

    # ---- input: pad (no zero-insertion!) and cut into flattened row blocks --
    x_pad = jnp.pad(x_nchw, ((0, 0), (0, 0),
                             (pad_t, Hp - H - pad_t),
                             (pad_t, W_in - W - pad_t)))
    x_flat = x_pad.reshape(N, Ci, Hp * W_in).astype(compute_dtype)
    x_blk = jnp.stack([x_flat[:, :, hb * th * W_in: hb * th * W_in + P_in]
                       for hb in range(n_hb)], axis=1)
    x_blk = x_blk.reshape(N * n_hb, Ci, P_in)
    # TODO(synk): avoid this second HBM copy of the (halo-overlapping) input
    # with a manual make_async_copy double-buffer on a memory_space=pl.ANY ref.

    # ---- per-phase packed weights: (s*s, T, 2*Co, Ci), h||g fused -----------
    wf2 = jnp.concatenate([wh[:, :, ::-1, ::-1], wg[:, :, ::-1, ::-1]],
                          axis=1)              # (Ci, 2*Co, K, K) flipped taps
    zero_tap = jnp.zeros((2 * Co, Ci), wh.dtype)
    phase_w = []
    for py in range(s):
        for px in range(s):
            taps = []
            for ry in roff:
                nh = ry * s + pe - py
                kh = nh // d
                kh_ok = (nh % d == 0) and (0 <= kh < K)
                for rx in roff:
                    nw = rx * s + pe - px
                    kw = nw // d
                    kw_ok = (nw % d == 0) and (0 <= kw < K)
                    taps.append(wf2[:, :, kh, kw].T if (kh_ok and kw_ok)
                                else zero_tap)
            phase_w.append(jnp.stack(taps, axis=0))          # (T, 2*Co, Ci)
    w_packed = jnp.stack(phase_w, axis=0).astype(compute_dtype)
    b_packed = jnp.concatenate([bh, bg]).reshape(2 * Co, 1).astype(jnp.float32)

    # flat lane offsets of the T taps inside a flattened (th_in, W_in) block
    offs = tuple(ry * W_in + rx for ry in roffp for rx in roffp)

    kernel = functools.partial(_gated_convt_phase_kernel, Ci=Ci, Co=Co, P=P,
                               offs=offs, activation=activation)
    vmem_limit = int(min(max(2 * _step_bytes(th), 16 * 2**20), vmem_cap // 2))

    out = pl.pallas_call(
        kernel,
        out_shape=jax.ShapeDtypeStruct((N * n_hb, s * s, Co, P), jnp.float32),
        grid_spec=pltpu.PrefetchScalarGridSpec(
            num_scalar_prefetch=0,
            grid=(N * n_hb, s * s),            # phase innermost: input block
            in_specs=[                         # is reused across the s*s phases
                pl.BlockSpec((1, Ci, P_in), lambda b, ph: (b, 0, 0)),
                pl.BlockSpec((1, T, 2 * Co, Ci), lambda b, ph: (ph, 0, 0, 0)),
                pl.BlockSpec((2 * Co, 1), lambda b, ph: (0, 0)),
            ],
            out_specs=pl.BlockSpec((1, 1, Co, P), lambda b, ph: (b, ph, 0, 0)),
        ),
        compiler_params=pltpu.CompilerParams(
            dimension_semantics=("parallel", "parallel"),
            vmem_limit_bytes=vmem_limit,
        ),
    )(x_blk, w_packed, b_packed)

    # (N*n_hb, s*s, Co, th*W_in) -> (N, Co, Ho, Wo): interleave phases, crop.
    y = out.reshape(N, n_hb, s, s, Co, th, W_in)
    y = jnp.transpose(y, (0, 4, 1, 5, 2, 6, 3))   # (N, Co, hb, qy, py, qx, px)
    y = y.reshape(N, Co, n_hb * th * s, W_in * s)
    return y[:, :, :Ho, :Wo].astype(x_nchw.dtype)


# --------------------------- pure-JAX reference ---------------------------- #
def _ref_gated_conv_transpose2d(x, wh, bh, wg, bg, stride, padding, dilation):
    K = wh.shape[2]
    pad_eff = dilation * (K - 1) - padding

    def convt(w, b):
        wf = jnp.transpose(w[:, :, ::-1, ::-1], (1, 0, 2, 3))   # (Co,Ci,K,K)
        y = lax.conv_general_dilated(
            x, wf, window_strides=(1, 1),
            padding=[(pad_eff, pad_eff), (pad_eff, pad_eff)],
            lhs_dilation=(stride, stride), rhs_dilation=(dilation, dilation),
            dimension_numbers=("NCHW", "OIHW", "NCHW"),
            precision=lax.Precision.HIGHEST)
        return y + b.reshape(1, -1, 1, 1)

    h = convt(wh, bh)
    g = convt(wg, bg)
    return h * jax.nn.sigmoid(g)


# ---------------------------------- main ----------------------------------- #
if __name__ == "__main__":
    N, Ci, H, W = 2, 4, 16, 16
    Co, K = 8, 3
    stride, padding, dilation = 2, 1, 1

    key = jax.random.PRNGKey(0)
    kx, kwh, kbh, kwg, kbg = jax.random.split(key, 5)

    # Deterministic init mimicking PyTorch's uniform(-1/sqrt(fan), 1/sqrt(fan)).
    bound = 1.0 / (Ci * K * K) ** 0.5
    x  = jax.random.normal(kx, (N, Ci, H, W), jnp.float32)
    wh = jax.random.uniform(kwh, (Ci, Co, K, K), jnp.float32, -bound, bound)
    bh = jax.random.uniform(kbh, (Co,),          jnp.float32, -bound, bound)
    wg = jax.random.uniform(kwg, (Ci, Co, K, K), jnp.float32, -bound, bound)
    bg = jax.random.uniform(kbg, (Co,),          jnp.float32, -bound, bound)

    Ho = (H - 1) * stride - 2 * padding + dilation * (K - 1) + 1
    Wo = (W - 1) * stride - 2 * padding + dilation * (K - 1) + 1

    # fp32 path: tight check against the pure-JAX reference.
    out_f32 = jax.block_until_ready(
        gated_conv_transpose2d(x, wh, bh, wg, bg, stride, padding, dilation,
                               compute_dtype=jnp.float32))
    # bf16 path (default): tight check against a bf16-rounded-input reference,
    # plus a loose sanity bound against the exact f32 reference.
    out_bf16 = jax.block_until_ready(
        gated_conv_transpose2d(x, wh, bh, wg, bg, stride, padding, dilation))

    ref = jax.block_until_ready(
        _ref_gated_conv_transpose2d(x, wh, bh, wg, bg, stride, padding, dilation))
    xr  = x.astype(jnp.bfloat16).astype(jnp.float32)
    whr = wh.astype(jnp.bfloat16).astype(jnp.float32)
    wgr = wg.astype(jnp.bfloat16).astype(jnp.float32)
    ref_rnd = jax.block_until_ready(
        _ref_gated_conv_transpose2d(xr, whr, bh, wgr, bg, stride, padding, dilation))

    assert out_f32.shape == out_bf16.shape == ref.shape == (N, Co, Ho, Wo), out_f32.shape
    err_f32 = float(jnp.max(jnp.abs(out_f32 - ref)))
    assert jnp.allclose(out_f32, ref, atol=5e-4, rtol=5e-4), err_f32
    err_rnd = float(jnp.max(jnp.abs(out_bf16 - ref_rnd)))
    assert jnp.allclose(out_bf16, ref_rnd, atol=2e-3, rtol=2e-3), err_rnd
    err_bf16 = float(jnp.max(jnp.abs(out_bf16 - ref)))
    assert jnp.allclose(out_bf16, ref, atol=7e-2, rtol=7e-2), err_bf16

    # stride=1 degenerate path (single phase, full K*K tap table).
    out1 = jax.block_until_ready(
        gated_conv_transpose2d(x, wh, bh, wg, bg, 1, 0, 1,
                               compute_dtype=jnp.float32))
    ref1 = jax.block_until_ready(
        _ref_gated_conv_transpose2d(x, wh, bh, wg, bg, 1, 0, 1))
    assert out1.shape == ref1.shape, (out1.shape, ref1.shape)
    err1 = float(jnp.max(jnp.abs(out1 - ref1)))
    assert jnp.allclose(out1, ref1, atol=5e-4, rtol=5e-4), err1

    print("KERNEL_OK")
</pallas_src>

<mosaic_0001>
module attributes {stable_mosaic.version = 11 : i64} {
  func.func @_gated_convt_phase_kernel(%arg0: i32, %arg1: i32, %arg2: memref<1x4x512xf32, #tpu.memory_space<vmem>>, %arg3: memref<1x4x16x4xf32, #tpu.memory_space<vmem>>, %arg4: memref<16x1xf32, #tpu.memory_space<vmem>>, %arg5: memref<1x1x8x384xf32, #tpu.memory_space<vmem>>) attributes {dimension_semantics = [#tpu.dimension_semantics<parallel>, #tpu.dimension_semantics<parallel>], iteration_bounds = array<i64: 2, 4>, scalar_prefetch = 0 : i64, scratch_operands = 0 : i64, tpu.core_type = #tpu.core_type<tc>, window_params = [{transform_indices = @transform_0, window_bounds = array<i64: 1, 4, 512>}, {transform_indices = @transform_1, window_bounds = array<i64: 1, 4, 16, 4>}, {pipeline_mode = #tpu.pipeline_mode<synchronous>, transform_indices = @transform_2, window_bounds = array<i64: 16, 1>}, {transform_indices = @transform_3, window_bounds = array<i64: 1, 1, 8, 384>}]} {
    %c0 = arith.constant 0 : index
    %c0_0 = arith.constant 0 : index
    %c0_1 = arith.constant 0 : index
    %0 = vector.load %arg2[%c0, %c0_0, %c0_1] : memref<1x4x512xf32, #tpu.memory_space<vmem>>, vector<1x4x512xf32>
    %1 = vector.shape_cast %0 : vector<1x4x512xf32> to vector<4x512xf32>
    %c0_2 = arith.constant 0 : index
    %c0_3 = arith.constant 0 : index
    %c0_4 = arith.constant 0 : index
    %c0_5 = arith.constant 0 : index
    %2 = vector.load %arg3[%c0_2, %c0_3, %c0_4, %c0_5] : memref<1x4x16x4xf32, #tpu.memory_space<vmem>>, vector<1x1x16x4xf32>
    %3 = vector.shape_cast %2 : vector<1x1x16x4xf32> to vector<16x4xf32>
    %4 = vector.extract_strided_slice %1 {offsets = [0, 0], sizes = [4, 384], strides = [1, 1]} : vector<4x512xf32> to vector<4x384xf32>
    %cst = arith.constant dense<0.000000e+00> : vector<16x384xf32>
    %5 = tpu.matmul %3, %4, %cst {dimension_numbers = #tpu.dot_dimension_numbers<[1], [0], [0], [1], [0, 0, 1, 1], [], []>} : vector<16x4xf32>, vector<4x384xf32>, vector<16x384xf32> -> vector<16x384xf32>
    %c0_6 = arith.constant 0 : index
    %c1 = arith.constant 1 : index
    %c0_7 = arith.constant 0 : index
    %c0_8 = arith.constant 0 : index
    %6 = vector.load %arg3[%c0_6, %c1, %c0_7, %c0_8] : memref<1x4x16x4xf32, #tpu.memory_space<vmem>>, vector<1x1x16x4xf32>
    %7 = vector.shape_cast %6 : vector<1x1x16x4xf32> to vector<16x4xf32>
    %8 = vector.extract_strided_slice %1 {offsets = [0, 1], sizes = [4, 384], strides = [1, 1]} : vector<4x512xf32> to vector<4x384xf32>
    %cst_9 = arith.constant dense<0.000000e+00> : vector<16x384xf32>
    %9 = tpu.matmul %7, %8, %cst_9 {dimension_numbers = #tpu.dot_dimension_numbers<[1], [0], [0], [1], [0, 0, 1, 1], [], []>} : vector<16x4xf32>, vector<4x384xf32>, vector<16x384xf32> -> vector<16x384xf32>
    %10 = arith.addf %5, %9 : vector<16x384xf32>
    %c0_10 = arith.constant 0 : index
    %c2 = arith.constant 2 : index
    %c0_11 = arith.constant 0 : index
    %c0_12 = arith.constant 0 : index
    %11 = vector.load %arg3[%c0_10, %c2, %c0_11, %c0_12] : memref<1x4x16x4xf32, #tpu.memory_space<vmem>>, vector<1x1x16x4xf32>
    %12 = vector.shape_cast %11 : vector<1x1x16x4xf32> to vector<16x4xf32>
    %13 = vector.extract_strided_slice %1 {offsets = [0, 24], sizes = [4, 384], strides = [1, 1]} : vector<4x512xf32> to vector<4x384xf32>
    %cst_13 = arith.constant dense<0.000000e+00> : vector<16x384xf32>
    %14 = tpu.matmul %12, %13, %cst_13 {dimension_numbers = #tpu.dot_dimension_numbers<[1], [0], [0], [1], [0, 0, 1, 1], [], []>} : vector<16x4xf32>, vector<4x384xf32>, vector<16x384xf32> -> vector<16x384xf32>
    %15 = arith.addf %10, %14 : vector<16x384xf32>
    %c0_14 = arith.constant 0 : index
    %c3 = arith.constant 3 : index
    %c0_15 = arith.constant 0 : index
    %c0_16 = arith.constant 0 : index
    %16 = vector.load %arg3[%c0_14, %c3, %c0_15, %c0_16] : memref<1x4x16x4xf32, #tpu.memory_space<vmem>>, vector<1x1x16x4xf32>
    %17 = vector.shape_cast %16 : vector<1x1x16x4xf32> to vector<16x4xf32>
    %18 = vector.extract_strided_slice %1 {offsets = [0, 25], sizes = [4, 384], strides = [1, 1]} : vector<4x512xf32> to vector<4x384xf32>
    %cst_17 = arith.constant dense<0.000000e+00> : vector<16x384xf32>
    %19 = tpu.matmul %17, %18, %cst_17 {dimension_numbers = #tpu.dot_dimension_numbers<[1], [0], [0], [1], [0, 0, 1, 1], [], []>} : vector<16x4xf32>, vector<4x384xf32>, vector<16x384xf32> -> vector<16x384xf32>
    %20 = arith.addf %15, %19 : vector<16x384xf32>
    %c0_18 = arith.constant 0 : index
    %c0_19 = arith.constant 0 : index
    %21 = vector.load %arg4[%c0_18, %c0_19] : memref<16x1xf32, #tpu.memory_space<vmem>>, vector<16x1xf32>
    %22 = vector.broadcast %21 : vector<16x1xf32> to vector<16x384xf32>
    %23 = arith.addf %20, %22 : vector<16x384xf32>
    %24 = vector.extract_strided_slice %23 {offsets = [0, 0], sizes = [8, 384], strides = [1, 1]} : vector<16x384xf32> to vector<8x384xf32>
    %25 = vector.extract_strided_slice %23 {offsets = [8, 0], sizes = [8, 384], strides = [1, 1]} : vector<16x384xf32> to vector<8x384xf32>
    %26 = arith.negf %25 : vector<8x384xf32>
    %27 = math.exp %26 : vector<8x384xf32>
    %cst_20 = arith.constant 1.000000e+00 : f32
    %28 = vector.broadcast %cst_20 : f32 to vector<8x384xf32>
    %29 = arith.addf %28, %27 : vector<8x384xf32>
    %30 = arith.divf %28, %29 : vector<8x384xf32>
    %31 = arith.mulf %24, %30 : vector<8x384xf32>
    %c0_21 = arith.constant 0 : index
    %c0_22 = arith.constant 0 : index
    %c0_23 = arith.constant 0 : index
    %c0_24 = arith.constant 0 : index
    %32 = vector.load %arg5[%c0_21, %c0_22, %c0_23, %c0_24] : memref<1x1x8x384xf32, #tpu.memory_space<vmem>>, vector<1x1x8x384xf32>
    %33 = vector.shape_cast %32 : vector<1x1x8x384xf32> to vector<8x384xf32>
    %34 = vector.shape_cast %31 : vector<8x384xf32> to vector<1x1x8x384xf32>
    tpu.vector_store %arg5[%c0_21, %c0_22, %c0_23, %c0_24], %34 {strides = array<i32>} : memref<1x1x8x384xf32, #tpu.memory_space<vmem>>, vector<1x1x8x384xf32>,
    return
  }
  func.func @transform_0(%arg0: i32, %arg1: i32) -> (i32, i32, i32) {
    %c0_i32 = arith.constant 0 : i32
    %c0_i32_0 = arith.constant 0 : i32
    %c0_i32_1 = arith.constant 0 : i32
    return %arg0, %c0_i32, %c0_i32_0 : i32, i32, i32
  }
  func.func @transform_1(%arg0: i32, %arg1: i32) -> (i32, i32, i32, i32) {
    %c0_i32 = arith.constant 0 : i32
    %c0_i32_0 = arith.constant 0 : i32
    %c0_i32_1 = arith.constant 0 : i32
    %c0_i32_2 = arith.constant 0 : i32
    return %arg1, %c0_i32, %c0_i32_0, %c0_i32_1 : i32, i32, i32, i32
  }
  func.func @transform_2(%arg0: i32, %arg1: i32) -> (i32, i32) {
    %c0_i32 = arith.constant 0 : i32
    %c0_i32_0 = arith.constant 0 : i32
    %c0_i32_1 = arith.constant 0 : i32
    return %c0_i32, %c0_i32_0 : i32, i32
  }
  func.func @transform_3(%arg0: i32, %arg1: i32) -> (i32, i32, i32, i32) {
    %c0_i32 = arith.constant 0 : i32
    %c0_i32_0 = arith.constant 0 : i32
    %c0_i32_1 = arith.constant 0 : i32
    return %arg0, %arg1, %c0_i32, %c0_i32_0 : i32, i32, i32, i32
  }
}

</mosaic_0001>

<llo_original>
// kernel: tpu_custom_call.1
$region0: #{tpu_custom_call.1}
  #allocation0 [shape = 'u32[]', space=smem, size = 0x4, offset = 0x4, fixed_abs, tag = 'smem constant byte address 0x4 - core index']
  #allocation1 [shape = 'u32[144,128]{1,0:T(1,128)}', space=vmem, size = 0x12000, scoped, tag = 'internal scratch']
  %s0 = inlined_call_operand.vmem [shape: f32[2,4,512], index: 0, kind: input, shape index: {}]
  %s1 = inlined_call_operand.vmem [shape: f32[4,4,16,4], index: 1, kind: input, shape index: {}]
  %s2 = inlined_call_operand.vmem [shape: f32[16,1], index: 2, kind: input, shape index: {}]
  %s3 = inlined_call_operand.hbm [shape: f32[2,4,8,384], index: 3, kind: output, shape index: {}]
  %s4 = sld [smem:[#allocation0]]
  $region45: #{tpu_custom_call.1} parent=0
    _
  %s6 = ssub.s32 1, %s4
  %s7 = scalar_select 0, %s6, %s4
  $region1: #{tpu_custom_call.1} parent=0
    #allocation2 [shape = 'u8[24576]{0}', space=vmem, size = 0x6000, scoped, tag = 'output window, operand 0']
    #allocation3 [shape = 's32[2]{0}', space=sflag, size = 0x8, scoped, tag = 'scoped memory for tpu_custom_call.1']
    %8 = vsyncpa [#allocation3], 0
    %s9 = scalar_lea.sflag [#allocation3], 1
    %10 = vsyncpa %s9, 0
    loop: start=0, step=1, limit=10
    $region2: #{tpu_custom_call.1} parent=1 // loop_pre_header
      _
    $region3: #{tpu_custom_call.1} parent=1 // loop_header
      %s12 = sphi 0, %s16
      %p13 = scmp.ge.s32.totalorder %s12, 10
      %s19 = sphi 0, %s31
      %s20 = sphi 0, %s27
      %s21 = sphi 0, %s19
      %s22 = sphi 0, %s20
      %s23 = sphi 0, %s21
      %s24 = sphi 0, %s22
      %s34 = sphi 0, %s36
      %s37 = sphi 0, %s34
      %s38 = sphi 0, %s37
      %s54 = sphi 0, %s38
      %s60 = sphi 0, %s62
      %s63 = sphi 0, %s60
      %s64 = sphi 0, %s63
      %s80 = sphi 0, %s64
      %s84 = sphi 0, %s84
      %s86 = sphi 0, %s84
      %s87 = sphi 0, %s86
      %s101 = sphi 0, %s87
      %s109 = sphi 0, %s111
      %s112 = sphi 0, %s109
      %s113 = sphi 0, %s112
      %s129 = sphi 0, %s113
    $region4: #{tpu_custom_call.1} parent=1 // loop_header_branch
      %15 = sbr.rel (%p13) target = $region8
    $region5: #{tpu_custom_call.1} parent=1 // loop_body
      %s17 = ssub.s32 %s12, 1
      %s18 = ssub.s32 %s12, 2
      %s25 = sadd.s32 1, %s20
      %p26 = scmp.ge.s32.totalorder %s25, 4
      %s27 = scalar_select %p26, 0, %s25
      %s28 = sadd.s32 1, %s19
      %s29 = scalar_select %p26, %s28, %s19
      %p30 = scmp.ge.s32.totalorder %s29, 2
      %s31 = scalar_select %p30, 0, %s29
      %s32 = ssub.s32 %s19, %s31
      %p33 = scmp.eq.s32.totalorder %s32, 0
      %s35 = sadd.s32 %s34, 1
      %s36 = scalar_select %p33, %s34, %s35
      %p39 = pneg %p33
      %p40 = scmp.eq.s32.totalorder %s12, 7
      %p41 = por %p39, %p40
      %p42 = scmp.ne.s32.totalorder %s34, %s37
      %p43 = scmp.eq.s32.totalorder %s12, 0
      %p44 = por %p42, %p43
      %p45 = scmp.ne.s32.totalorder %s34, %s37
      %p46 = scmp.eq.s32.totalorder %s17, 7
      %p47 = por %p45, %p46
      %p48 = scmp.ne.s32.totalorder %s37, %s38
      %p49 = scmp.eq.s32.totalorder %s17, 0
      %p50 = por %p48, %p49
      %p51 = scmp.ne.s32.totalorder %s37, %s38
      %p52 = scmp.eq.s32.totalorder %s18, 7
      %p53 = por %p51, %p52
      %p55 = scmp.ne.s32.totalorder %s38, %s54
      %p56 = scmp.eq.s32.totalorder %s18, 0
      %p57 = por %p55, %p56
      %s58 = ssub.s32 %s20, %s27
      %p59 = scmp.eq.s32.totalorder %s58, 0
      %s61 = sadd.s32 %s60, 1
      %s62 = scalar_select %p59, %s60, %s61
      %p65 = pneg %p59
      %p66 = scmp.eq.s32.totalorder %s12, 7
      %p67 = por %p65, %p66
      %p68 = scmp.ne.s32.totalorder %s60, %s63
      %p69 = scmp.eq.s32.totalorder %s12, 0
      %p70 = por %p68, %p69
      %p71 = scmp.ne.s32.totalorder %s60, %s63
      %p72 = scmp.eq.s32.totalorder %s17, 7
      %p73 = por %p71, %p72
      %p74 = scmp.ne.s32.totalorder %s63, %s64
      %p75 = scmp.eq.s32.totalorder %s17, 0
      %p76 = por %p74, %p75
      %p77 = scmp.ne.s32.totalorder %s63, %s64
      %p78 = scmp.eq.s32.totalorder %s18, 7
      %p79 = por %p77, %p78
      %p81 = scmp.ne.s32.totalorder %s64, %s80
      %p82 = scmp.eq.s32.totalorder %s18, 0
      %p83 = por %p81, %p82
      %s85 = sadd.s32 %s84, 1
      %p88 = scmp.eq.s32.totalorder %s12, 7
      %p89 = scmp.ne.s32.totalorder %s84, %s86
      %p90 = scmp.eq.s32.totalorder %s12, 0
      %p91 = por %p89, %p90
      %p92 = scmp.ne.s32.totalorder %s84, %s86
      %p93 = scmp.eq.s32.totalorder %s17, 7
      %p94 = por %p92, %p93
      %p95 = scmp.ne.s32.totalorder %s86, %s87
      %p96 = scmp.eq.s32.totalorder %s17, 0
      %p97 = por %p95, %p96
      %p98 = scmp.ne.s32.totalorder %s86, %s87
      %p99 = scmp.eq.s32.totalorder %s18, 7
      %p100 = por %p98, %p99
      %p102 = scmp.ne.s32.totalorder %s87, %s101
      %p103 = scmp.eq.s32.totalorder %s18, 0
      %p104 = por %p102, %p103
      %s105 = ssub.s32 %s19, %s31
      %s106 = ssub.s32 %s20, %s27
      %s107 = sor.u32 %s105, %s106
      %p108 = scmp.eq.s32.totalorder %s107, 0
      %s110 = sadd.s32 %s109, 1
      %s111 = scalar_select %p108, %s109, %s110
      %p114 = pneg %p108
      %p115 = scmp.eq.s32.totalorder %s12, 7
      %p116 = por %p114, %p115
      %p117 = scmp.ne.s32.totalorder %s109, %s112
      %p118 = scmp.eq.s32.totalorder %s12, 0
      %p119 = por %p117, %p118
      %p120 = scmp.ne.s32.totalorder %s109, %s112
      %p121 = scmp.eq.s32.totalorder %s17, 7
      %p122 = por %p120, %p121
      %p123 = scmp.ne.s32.totalorder %s112, %s113
      %p124 = scmp.eq.s32.totalorder %s17, 0
      %p125 = por %p123, %p124
      %p126 = scmp.ne.s32.totalorder %s112, %s113
      %p127 = scmp.eq.s32.totalorder %s18, 7
      %p128 = por %p126, %p127
      %p130 = scmp.ne.s32.totalorder %s113, %s129
      %p131 = scmp.eq.s32.totalorder %s18, 0
      %p132 = por %p130, %p131
      %p133 = scmp.le.s32.totalorder 1, %s12
      %p134 = scmp.lt.s32.totalorder %s12, 9
      %p135 = pnand %p133, %p134
      %p136 = pneg %p135
      // Predicated region
      $region9: #{tpu_custom_call.1} parent=5 // pred_check
        _
      $region10: #{tpu_custom_call.1} parent=5 // pred_check_branch
        %138 = sbr.rel (%p135) target = $region12
      $region11: #{tpu_custom_call.1} parent=5 // pred_region
        %s139 = ssub.s32 %s12, 1
        // Predicated region
        $region13: #{tpu_custom_call.1} parent=11 // pred_check
          %p140 = pneg %p97
        $region14: #{tpu_custom_call.1} parent=11 // pred_check_branch
          %142 = sbr.rel (%p140) target = $region16
        $region15: #{tpu_custom_call.1} parent=11 // pred_region
          _
        $region16: #{tpu_custom_call.1} parent=11 // pred_fallthru
          _
      $region12: #{tpu_custom_call.1} parent=5 // pred_fallthru
        _
      %p143 = scmp.lt.s32.totalorder %s12, 8
      // Predicated region
      $region17: #{tpu_custom_call.1} parent=5 // pred_check
        %p144 = pneg %p143
      $region18: #{tpu_custom_call.1} parent=5 // pred_check_branch
        %146 = sbr.rel (%p144) target = $region20
      $region19: #{tpu_custom_call.1} parent=5 // pred_region
        // Predicated region
        $region21: #{tpu_custom_call.1} parent=19 // pred_check
          %p147 = pneg %p44
        $region22: #{tpu_custom_call.1} parent=19 // pred_check_branch
          %149 = sbr.rel (%p147) target = $region24
        $region23: #{tpu_custom_call.1} parent=19 // pred_region
          %p150 = scmp.lt.s32.totalorder %s19, 1
          %s151 = scalar_select %p150, %s19, 1
          %s152 = smul.addr %s151, 4
          %s153 = smul.addr %s152, 4
          %s154 = scalar_lea.vmem %s0, %s153
        $region24: #{tpu_custom_call.1} parent=19 // pred_fallthru
          _
        // Predicated region
        $region25: #{tpu_custom_call.1} parent=19 // pred_check
          %p155 = pneg %p70
        $region26: #{tpu_custom_call.1} parent=19 // pred_check_branch
          %157 = sbr.rel (%p155) target = $region28
        $region27: #{tpu_custom_call.1} parent=19 // pred_region
          %p158 = scmp.lt.s32.totalorder %s20, 3
          %s159 = scalar_select %p158, %s20, 3
          %s160 = smul.addr %s159, 8
          %s161 = smul.addr %s160, 8
          %s162 = scalar_lea.vmem %s1, %s161
        $region28: #{tpu_custom_call.1} parent=19 // pred_fallthru
          _
      $region20: #{tpu_custom_call.1} parent=5 // pred_fallthru
        _
      %p163 = scmp.le.s32.totalorder 1, %s12
      %p164 = scmp.lt.s32.totalorder %s12, 9
      %p165 = pnand %p163, %p164
      %p166 = pneg %p165
      // Predicated region
      $region29: #{tpu_custom_call.1} parent=5 // pred_check
        _
      $region30: #{tpu_custom_call.1} parent=5 // pred_check_branch
        %168 = sbr.rel (%p165) target = $region32
      $region31: #{tpu_custom_call.1} parent=5 // pred_region
        %s169 = ssub.s32 %s12, 1
        %p170 = scmp.lt.s32.totalorder %s21, 1
        %s171 = scalar_select %p170, %s21, 1
        %s172 = smul.addr %s171, 4
        %s173 = smul.addr %s172, 4
        %s174 = scalar_lea.vmem %s0, %s173
        %p175 = pneg %p50
        %p176 = pneg %p47
        %p177 = scmp.lt.s32.totalorder %s22, 3
        %s178 = scalar_select %p177, %s22, 3
        %s179 = smul.addr %s178, 8
        %s180 = smul.addr %s179, 8
        %s181 = scalar_lea.vmem %s1, %s180
        %p182 = pneg %p76
        %p183 = pneg %p73
        %p184 = pneg %p97
        %p185 = pneg %p94
        %p186 = pneg %p125
        %p187 = pneg %p122
        %s188 = sand.u32 %s112, 1
        %s189 = scalar_lea.sflag [#allocation3], %s188
        %s190 = sand.u32 %s112, 1
        %s191 = smul.addr %s190, 24
        %s192 = scalar_lea.vmem [#allocation2], %s191
        %p193 = scmp.lt.s32.totalorder %s21, 1
        %s194 = scalar_select %p193, %s21, 1
        %s195 = smul.addr %s194, 4
        %s196 = smul.addr %s195, 4
        %s197 = scalar_lea.vmem %s0, %s196
        %p198 = scmp.lt.s32.totalorder %s22, 3
        %s199 = scalar_select %p198, %s22, 3
        %s200 = smul.addr %s199, 8
        %s201 = smul.addr %s200, 8
        %s202 = scalar_lea.vmem %s1, %s201
        %v203 = vld [vmem:[%s197] sm:$0xff]
        %v204 = vld [vmem:[%s197 + $0x8] sm:$0xff]
        %v205 = vld [vmem:[%s202] sm:$0xff]
        %v206 = vld [vmem:[%s202 + $0x8] sm:$0xff]
        %s207 = scalar_lea.vmem %s202, 16
        %v208 = vld [vmem:[%s207] sm:$0xff]
        %v209 = vld [vmem:[%s207 + $0x8] sm:$0xff]
        %v212 = vcombine.high %v203, %v203
        %v213 = vcombine.high %v204, %v204
        %214 = vrot.lane.b32.xlu0 %v203, 127
        %v215 = vpop.permute.xlu0 %214
        %216 = vrot.lane.b32.xlu0 %v212, 127
        %v217 = vpop.permute.xlu0 %216
        %218 = vrot.lane.b32.xlu0 %v204, 127
        %v219 = vpop.permute.xlu0 %218
        %220 = vrot.lane.b32.xlu0 %v213, 127
        %v221 = vpop.permute.xlu0 %220
        %vm222 = vcmask 1039360
        %v223 = vsel %vm222, %v215, %v217
        %v224 = vsel %vm222, %v217, %v219
        %v225 = vsel %vm222, %v219, %v221
        %vm226 = vcmask 31744
        %v228 = vsel %vm226, %v208, 0
        %v231 = vsel %vm226, %v209, 0
        %vm233 = vcmask 1043456
        %v234 = vsel %vm233, %v223, 0
        %v236 = vsel %vm233, %v224, 0
        %v238 = vsel %vm233, %v225, 0
        %240 = vmatprep.subr.mxu0 %v236
        %241 = vmatpush1.msra.mxu0 %v234
        %242 = vmatprep.subr.mxu0 0.0
        %243 = vmatpush1.msra.mxu0 0.0
        %244 = vmatprep.subr.mxu0 0.0
        %245 = vmatpush1.msra.mxu0 0.0
        %246 = vmatprep.subr.mxu0 0.0
        %247 = vmatpush1.msra.mxu0 0.0
        %248 = vmatprep.subr.mxu0 0.0
        %249 = vmatpush1.msra.mxu0 0.0
        %250 = vmatprep.subr.mxu0 0.0
        %251 = vmatpush1.msra.mxu0 0.0
        %252 = vmatprep.subr.mxu0 0.0
        %253 = vmatpush1.msra.mxu0 0.0
        %254 = vmatprep.subr.mxu0 0.0
        %255 = vmatpush1.msra.mxu0 0.0
        %256 = vmatprep.subr.mxu0 0.0
        %257 = vmatpush1.msra.mxu0 0.0
        %258 = vmatprep.subr.mxu0 0.0
        %259 = vmatpush1.msra.mxu0 0.0
        %260 = vmatprep.subr.mxu0 0.0
        %261 = vmatpush1.msra.mxu0 0.0
        %262 = vmatprep.subr.mxu0 0.0
        %263 = vmatpush1.msra.mxu0 0.0
        %264 = vmatprep.subr.mxu0 0.0
        %265 = vmatpush1.msra.mxu0 0.0
        %266 = vmatprep.subr.mxu0 0.0
        %267 = vmatpush1.msra.mxu0 0.0
        %268 = vmatprep.subr.mxu0 0.0
        %269 = vmatpush1.msra.mxu0 0.0
        %270 = vmatprep.subr.mxu0 0.0
        %271 = vmatpush1.msra.mxu0 0.0
        %272 = vmatprep.subr.mxu0 0.0
        %273 = vmatpush1.msra.mxu0 0.0
        %274 = vmatprep.subr.mxu0 0.0
        %275 = vmatpush1.msra.mxu0 0.0
        %276 = vmatprep.subr.mxu0 0.0
        %277 = vmatpush1.msra.mxu0 0.0
        %278 = vmatprep.subr.mxu0 0.0
        %279 = vmatpush1.msra.mxu0 0.0
        %280 = vmatprep.subr.mxu0 0.0
        %281 = vmatpush1.msra.mxu0 0.0
        %282 = vmatprep.subr.mxu0 0.0
        %283 = vmatpush1.msra.mxu0 0.0
        %284 = vmatprep.subr.mxu0 0.0
        %285 = vmatpush1.msra.mxu0 0.0
        %286 = vmatprep.subr.mxu0 0.0
        %287 = vmatpush1.msra.mxu0 0.0
        %288 = vmatprep.subr.mxu0 0.0
        %289 = vmatpush1.msra.mxu0 0.0
        %290 = vmatprep.subr.mxu0 0.0
        %291 = vmatpush1.msra.mxu0 0.0
        %292 = vmatprep.subr.mxu0 0.0
        %293 = vmatpush1.msra.mxu0 0.0
        %294 = vmatprep.subr.mxu0 0.0
        %295 = vmatpush1.msra.mxu0 0.0
        %296 = vmatprep.subr.mxu0 0.0
        %297 = vmatpush1.msra.mxu0 0.0
        %298 = vmatprep.subr.mxu0 0.0
        %299 = vmatpush1.msra.mxu0 0.0
        %300 = vmatprep.subr.mxu0 0.0
        %301 = vmatpush1.msra.mxu0 0.0
        %302 = vmatprep.subr.mxu0 0.0
        %303 = vmatpush1.msra.mxu0 0.0
        %304 = vmatprep.mubr.f32.mxu0 0.0
        %305 = vmatmul.mubr.f32.gmra.mrb[0].mxu0 %v228
        %v306 = vpop.f32.mrb[0].mxu0
        %v307 = vadd.f32 0.0, %v306
        %v308 = vpop.f32.mrb[0].mxu0
        %v309 = vadd.f32 0.0, %v308
        %310 = vmatprep.mubr.f32.mxu0 0.0
        %311 = vmatmul.mubr.f32.gmra.mrb[0].mxu0 %v231
        %v312 = vpop.f32.mrb[0].mxu0
        %v313 = vadd.f32 0.0, %v312
        %v314 = vpop.f32.mrb[0].mxu0
        %v315 = vadd.f32 0.0, %v314
        %316 = vdwg.mxu0
        %317 = vmatprep.subr.mxu0 0.0
        %318 = vmatpush1.msra.mxu0 %v238
        %319 = vmatprep.subr.mxu0 0.0
        %320 = vmatpush1.msra.mxu0 0.0
        %321 = vmatprep.subr.mxu0 0.0
        %322 = vmatpush1.msra.mxu0 0.0
        %323 = vmatprep.subr.mxu0 0.0
        %324 = vmatpush1.msra.mxu0 0.0
        %325 = vmatprep.subr.mxu0 0.0
        %326 = vmatpush1.msra.mxu0 0.0
        %327 = vmatprep.subr.mxu0 0.0
        %328 = vmatpush1.msra.mxu0 0.0
        %329 = vmatprep.subr.mxu0 0.0
        %330 = vmatpush1.msra.mxu0 0.0
        %331 = vmatprep.subr.mxu0 0.0
        %332 = vmatpush1.msra.mxu0 0.0
        %333 = vmatprep.subr.mxu0 0.0
        %334 = vmatpush1.msra.mxu0 0.0
        %335 = vmatprep.subr.mxu0 0.0
        %336 = vmatpush1.msra.mxu0 0.0
        %337 = vmatprep.subr.mxu0 0.0
        %338 = vmatpush1.msra.mxu0 0.0
        %339 = vmatprep.subr.mxu0 0.0
        %340 = vmatpush1.msra.mxu0 0.0
        %341 = vmatprep.subr.mxu0 0.0
        %342 = vmatpush1.msra.mxu0 0.0
        %343 = vmatprep.subr.mxu0 0.0
        %344 = vmatpush1.msra.mxu0 0.0
        %345 = vmatprep.subr.mxu0 0.0
        %346 = vmatpush1.msra.mxu0 0.0
        %347 = vmatprep.subr.mxu0 0.0
        %348 = vmatpush1.msra.mxu0 0.0
        %349 = vmatprep.subr.mxu0 0.0
        %350 = vmatpush1.msra.mxu0 0.0
        %351 = vmatprep.subr.mxu0 0.0
        %352 = vmatpush1.msra.mxu0 0.0
        %353 = vmatprep.subr.mxu0 0.0
        %354 = vmatpush1.msra.mxu0 0.0
        %355 = vmatprep.subr.mxu0 0.0
        %356 = vmatpush1.msra.mxu0 0.0
        %357 = vmatprep.subr.mxu0 0.0
        %358 = vmatpush1.msra.mxu0 0.0
        %359 = vmatprep.subr.mxu0 0.0
        %360 = vmatpush1.msra.mxu0 0.0
        %361 = vmatprep.subr.mxu0 0.0
        %362 = vmatpush1.msra.mxu0 0.0
        %363 = vmatprep.subr.mxu0 0.0
        %364 = vmatpush1.msra.mxu0 0.0
        %365 = vmatprep.subr.mxu0 0.0
        %366 = vmatpush1.msra.mxu0 0.0
        %367 = vmatprep.subr.mxu0 0.0
        %368 = vmatpush1.msra.mxu0 0.0
        %369 = vmatprep.subr.mxu0 0.0
        %370 = vmatpush1.msra.mxu0 0.0
        %371 = vmatprep.subr.mxu0 0.0
        %372 = vmatpush1.msra.mxu0 0.0
        %373 = vmatprep.subr.mxu0 0.0
        %374 = vmatpush1.msra.mxu0 0.0
        %375 = vmatprep.subr.mxu0 0.0
        %376 = vmatpush1.msra.mxu0 0.0
        %377 = vmatprep.subr.mxu0 0.0
        %378 = vmatpush1.msra.mxu0 0.0
        %379 = vmatprep.subr.mxu0 0.0
        %380 = vmatpush1.msra.mxu0 0.0
        %381 = vmatprep.mubr.f32.mxu0 0.0
        %382 = vmatmul.mubr.f32.gmra.mrb[0].mxu0 %v228
        %v383 = vpop.f32.mrb[0].mxu0
        %v384 = vadd.f32 0.0, %v383
        %v385 = vpop.f32.mrb[0].mxu0
        %386 = vmatprep.mubr.f32.mxu0 0.0
        %387 = vmatmul.mubr.f32.gmra.mrb[0].mxu0 %v231
        %v388 = vpop.f32.mrb[0].mxu0
        %v389 = vadd.f32 0.0, %v388
        %v390 = vpop.f32.mrb[0].mxu0
        %391 = vdwg.mxu0
        %v393 = vsel %vm226, %v205, 0
        %v396 = vsel %vm226, %v206, 0
        %v398 = vsel %vm233, %v203, 0
        %v400 = vsel %vm233, %v212, 0
        %v402 = vsel %vm233, %v204, 0
        %404 = vmatprep.subr.mxu0 %v400
        %405 = vmatpush1.msra.mxu0 %v398
        %406 = vmatprep.subr.mxu0 0.0
        %407 = vmatpush1.msra.mxu0 0.0
        %408 = vmatprep.subr.mxu0 0.0
        %409 = vmatpush1.msra.mxu0 0.0
        %410 = vmatprep.subr.mxu0 0.0
        %411 = vmatpush1.msra.mxu0 0.0
        %412 = vmatprep.subr.mxu0 0.0
        %413 = vmatpush1.msra.mxu0 0.0
        %414 = vmatprep.subr.mxu0 0.0
        %415 = vmatpush1.msra.mxu0 0.0
        %416 = vmatprep.subr.mxu0 0.0
        %417 = vmatpush1.msra.mxu0 0.0
        %418 = vmatprep.subr.mxu0 0.0
        %419 = vmatpush1.msra.mxu0 0.0
        %420 = vmatprep.subr.mxu0 0.0
        %421 = vmatpush1.msra.mxu0 0.0
        %422 = vmatprep.subr.mxu0 0.0
        %423 = vmatpush1.msra.mxu0 0.0
        %424 = vmatprep.subr.mxu0 0.0
        %425 = vmatpush1.msra.mxu0 0.0
        %426 = vmatprep.subr.mxu0 0.0
        %427 = vmatpush1.msra.mxu0 0.0
        %428 = vmatprep.subr.mxu0 0.0
        %429 = vmatpush1.msra.mxu0 0.0
        %430 = vmatprep.subr.mxu0 0.0
        %431 = vmatpush1.msra.mxu0 0.0
        %432 = vmatprep.subr.mxu0 0.0
        %433 = vmatpush1.msra.mxu0 0.0
        %434 = vmatprep.subr.mxu0 0.0
        %435 = vmatpush1.msra.mxu0 0.0
        %436 = vmatprep.subr.mxu0 0.0
        %437 = vmatpush1.msra.mxu0 0.0
        %438 = vmatprep.subr.mxu0 0.0
        %439 = vmatpush1.msra.mxu0 0.0
        %440 = vmatprep.subr.mxu0 0.0
        %441 = vmatpush1.msra.mxu0 0.0
        %442 = vmatprep.subr.mxu0 0.0
        %443 = vmatpush1.msra.mxu0 0.0
        %444 = vmatprep.subr.mxu0 0.0
        %445 = vmatpush1.msra.mxu0 0.0
        %446 = vmatprep.subr.mxu0 0.0
        %447 = vmatpush1.msra.mxu0 0.0
        %448 = vmatprep.subr.mxu0 0.0
        %449 = vmatpush1.msra.mxu0 0.0
        %450 = vmatprep.subr.mxu0 0.0
        %451 = vmatpush1.msra.mxu0 0.0
        %452 = vmatprep.subr.mxu0 0.0
        %453 = vmatpush1.msra.mxu0 0.0
        %454 = vmatprep.subr.mxu0 0.0
        %455 = vmatpush1.msra.mxu0 0.0
        %456 = vmatprep.subr.mxu0 0.0
        %457 = vmatpush1.msra.mxu0 0.0
        %458 = vmatprep.subr.mxu0 0.0
        %459 = vmatpush1.msra.mxu0 0.0
        %460 = vmatprep.subr.mxu0 0.0
        %461 = vmatpush1.msra.mxu0 0.0
        %462 = vmatprep.subr.mxu0 0.0
        %463 = vmatpush1.msra.mxu0 0.0
        %464 = vmatprep.subr.mxu0 0.0
        %465 = vmatpush1.msra.mxu0 0.0
        %466 = vmatprep.subr.mxu0 0.0
        %467 = vmatpush1.msra.mxu0 0.0
        %468 = vmatprep.mubr.f32.mxu0 0.0
        %469 = vmatmul.mubr.f32.gmra.mrb[0].mxu0 %v393
        %v470 = vpop.f32.mrb[0].mxu0
        %v471 = vadd.f32 %v307, %v470
        %v472 = vpop.f32.mrb[0].mxu0
        %v473 = vadd.f32 %v309, %v472
        %474 = vmatprep.mubr.f32.mxu0 0.0
        %475 = vmatmul.mubr.f32.gmra.mrb[0].mxu0 %v396
        %v476 = vpop.f32.mrb[0].mxu0
        %v477 = vadd.f32 %v313, %v476
        %v478 = vpop.f32.mrb[0].mxu0
        %v479 = vadd.f32 %v315, %v478
        %480 = vdwg.mxu0
        %481 = vmatprep.subr.mxu0 0.0
        %482 = vmatpush1.msra.mxu0 %v402
        %483 = vmatprep.subr.mxu0 0.0
        %484 = vmatpush1.msra.mxu0 0.0
        %485 = vmatprep.subr.mxu0 0.0
        %486 = vmatpush1.msra.mxu0 0.0
        %487 = vmatprep.subr.mxu0 0.0
        %488 = vmatpush1.msra.mxu0 0.0
        %489 = vmatprep.subr.mxu0 0.0
        %490 = vmatpush1.msra.mxu0 0.0
        %491 = vmatprep.subr.mxu0 0.0
        %492 = vmatpush1.msra.mxu0 0.0
        %493 = vmatprep.subr.mxu0 0.0
        %494 = vmatpush1.msra.mxu0 0.0
        %495 = vmatprep.subr.mxu0 0.0
        %496 = vmatpush1.msra.mxu0 0.0
        %497 = vmatprep.subr.mxu0 0.0
        %498 = vmatpush1.msra.mxu0 0.0
        %499 = vmatprep.subr.mxu0 0.0
        %500 = vmatpush1.msra.mxu0 0.0
        %501 = vmatprep.subr.mxu0 0.0
        %502 = vmatpush1.msra.mxu0 0.0
        %503 = vmatprep.subr.mxu0 0.0
        %504 = vmatpush1.msra.mxu0 0.0
        %505 = vmatprep.subr.mxu0 0.0
        %506 = vmatpush1.msra.mxu0 0.0
        %507 = vmatprep.subr.mxu0 0.0
        %508 = vmatpush1.msra.mxu0 0.0
        %509 = vmatprep.subr.mxu0 0.0
        %510 = vmatpush1.msra.mxu0 0.0
        %511 = vmatprep.subr.mxu0 0.0
        %512 = vmatpush1.msra.mxu0 0.0
        %513 = vmatprep.subr.mxu0 0.0
        %514 = vmatpush1.msra.mxu0 0.0
        %515 = vmatprep.subr.mxu0 0.0
        %516 = vmatpush1.msra.mxu0 0.0
        %517 = vmatprep.subr.mxu0 0.0
        %518 = vmatpush1.msra.mxu0 0.0
        %519 = vmatprep.subr.mxu0 0.0
        %520 = vmatpush1.msra.mxu0 0.0
        %521 = vmatprep.subr.mxu0 0.0
        %522 = vmatpush1.msra.mxu0 0.0
        %523 = vmatprep.subr.mxu0 0.0
        %524 = vmatpush1.msra.mxu0 0.0
        %525 = vmatprep.subr.mxu0 0.0
        %526 = vmatpush1.msra.mxu0 0.0
        %527 = vmatprep.subr.mxu0 0.0
        %528 = vmatpush1.msra.mxu0 0.0
        %529 = vmatprep.subr.mxu0 0.0
        %530 = vmatpush1.msra.mxu0 0.0
        %531 = vmatprep.subr.mxu0 0.0
        %532 = vmatpush1.msra.mxu0 0.0
        %533 = vmatprep.subr.mxu0 0.0
        %534 = vmatpush1.msra.mxu0 0.0
        %535 = vmatprep.subr.mxu0 0.0
        %536 = vmatpush1.msra.mxu0 0.0
        %537 = vmatprep.subr.mxu0 0.0
        %538 = vmatpush1.msra.mxu0 0.0
        %539 = vmatprep.subr.mxu0 0.0
        %540 = vmatpush1.msra.mxu0 0.0
        %541 = vmatprep.subr.mxu0 0.0
        %542 = vmatpush1.msra.mxu0 0.0
        %543 = vmatprep.subr.mxu0 0.0
        %544 = vmatpush1.msra.mxu0 0.0
        %545 = vmatprep.mubr.f32.mxu0 0.0
        %546 = vmatmul.mubr.f32.gmra.mrb[0].mxu0 %v393
        %v547 = vpop.f32.mrb[0].mxu0
        %v548 = vadd.f32 %v384, %v547
        %v549 = vpop.f32.mrb[0].mxu0
        %550 = vmatprep.mubr.f32.mxu0 0.0
        %551 = vmatmul.mubr.f32.gmra.mrb[0].mxu0 %v396
        %v552 = vpop.f32.mrb[0].mxu0
        %v553 = vadd.f32 %v389, %v552
        %v554 = vpop.f32.mrb[0].mxu0
        %555 = vdwg.mxu0
        %s556 = scalar_lea.vmem %s202, 32
        %v557 = vld [vmem:[%s556] sm:$0xff]
        %v558 = vld [vmem:[%s556 + $0x8] sm:$0xff]
        %559 = vrot.lane.b32.xlu0 %v203, 104
        %v560 = vpop.permute.xlu0 %559
        %561 = vrot.lane.b32.xlu0 %v212, 104
        %v562 = vpop.permute.xlu0 %561
        %563 = vrot.lane.b32.xlu0 %v204, 104
        %v564 = vpop.permute.xlu0 %563
        %565 = vrot.lane.b32.xlu0 %v213, 104
        %v566 = vpop.permute.xlu0 %565
        %vm567 = vcmask 850944
        %v568 = vsel %vm567, %v560, %v562
        %v569 = vsel %vm567, %v562, %v564
        %v570 = vsel %vm567, %v564, %v566
        %v572 = vsel %vm226, %v557, 0
        %v575 = vsel %vm226, %v558, 0
        %v577 = vsel %vm233, %v568, 0
        %v579 = vsel %vm233, %v569, 0
        %v581 = vsel %vm233, %v570, 0
        %583 = vmatprep.subr.mxu0 %v579
        %584 = vmatpush1.msra.mxu0 %v577
        %585 = vmatprep.subr.mxu0 0.0
        %586 = vmatpush1.msra.mxu0 0.0
        %587 = vmatprep.subr.mxu0 0.0
        %588 = vmatpush1.msra.mxu0 0.0
        %589 = vmatprep.subr.mxu0 0.0
        %590 = vmatpush1.msra.mxu0 0.0
        %591 = vmatprep.subr.mxu0 0.0
        %592 = vmatpush1.msra.mxu0 0.0
        %593 = vmatprep.subr.mxu0 0.0
        %594 = vmatpush1.msra.mxu0 0.0
        %595 = vmatprep.subr.mxu0 0.0
        %596 = vmatpush1.msra.mxu0 0.0
        %597 = vmatprep.subr.mxu0 0.0
        %598 = vmatpush1.msra.mxu0 0.0
        %599 = vmatprep.subr.mxu0 0.0
        %600 = vmatpush1.msra.mxu0 0.0
        %601 = vmatprep.subr.mxu0 0.0
        %602 = vmatpush1.msra.mxu0 0.0
        %603 = vmatprep.subr.mxu0 0.0
        %604 = vmatpush1.msra.mxu0 0.0
        %605 = vmatprep.subr.mxu0 0.0
        %606 = vmatpush1.msra.mxu0 0.0
        %607 = vmatprep.subr.mxu0 0.0
        %608 = vmatpush1.msra.mxu0 0.0
        %609 = vmatprep.subr.mxu0 0.0
        %610 = vmatpush1.msra.mxu0 0.0
        %611 = vmatprep.subr.mxu0 0.0
        %612 = vmatpush1.msra.mxu0 0.0
        %613 = vmatprep.subr.mxu0 0.0
        %614 = vmatpush1.msra.mxu0 0.0
        %615 = vmatprep.subr.mxu0 0.0
        %616 = vmatpush1.msra.mxu0 0.0
        %617 = vmatprep.subr.mxu0 0.0
        %618 = vmatpush1.msra.mxu0 0.0
        %619 = vmatprep.subr.mxu0 0.0
        %620 = vmatpush1.msra.mxu0 0.0
        %621 = vmatprep.subr.mxu0 0.0
        %622 = vmatpush1.msra.mxu0 0.0
        %623 = vmatprep.subr.mxu0 0.0
        %624 = vmatpush1.msra.mxu0 0.0
        %625 = vmatprep.subr.mxu0 0.0
        %626 = vmatpush1.msra.mxu0 0.0
        %627 = vmatprep.subr.mxu0 0.0
        %628 = vmatpush1.msra.mxu0 0.0
        %629 = vmatprep.subr.mxu0 0.0
        %630 = vmatpush1.msra.mxu0 0.0
        %631 = vmatprep.subr.mxu0 0.0
        %632 = vmatpush1.msra.mxu0 0.0
        %633 = vmatprep.subr.mxu0 0.0
        %634 = vmatpush1.msra.mxu0 0.0
        %635 = vmatprep.subr.mxu0 0.0
        %636 = vmatpush1.msra.mxu0 0.0
        %637 = vmatprep.subr.mxu0 0.0
        %638 = vmatpush1.msra.mxu0 0.0
        %639 = vmatprep.subr.mxu0 0.0
        %640 = vmatpush1.msra.mxu0 0.0
        %641 = vmatprep.subr.mxu0 0.0
        %642 = vmatpush1.msra.mxu0 0.0
        %643 = vmatprep.subr.mxu0 0.0
        %644 = vmatpush1.msra.mxu0 0.0
        %645 = vmatprep.subr.mxu0 0.0
        %646 = vmatpush1.msra.mxu0 0.0
        %647 = vmatprep.mubr.f32.mxu0 0.0
        %648 = vmatmul.mubr.f32.gmra.mrb[0].mxu0 %v572
        %v649 = vpop.f32.mrb[0].mxu0
        %v650 = vadd.f32 0.0, %v649
        %v651 = vpop.f32.mrb[0].mxu0
        %v652 = vadd.f32 0.0, %v651
        %653 = vmatprep.mubr.f32.mxu0 0.0
        %654 = vmatmul.mubr.f32.gmra.mrb[0].mxu0 %v575
        %v655 = vpop.f32.mrb[0].mxu0
        %v656 = vadd.f32 0.0, %v655
        %v657 = vpop.f32.mrb[0].mxu0
        %v658 = vadd.f32 0.0, %v657
        %659 = vdwg.mxu0
        %660 = vmatprep.subr.mxu0 0.0
        %661 = vmatpush1.msra.mxu0 %v581
        %662 = vmatprep.subr.mxu0 0.0
        %663 = vmatpush1.msra.mxu0 0.0
        %664 = vmatprep.subr.mxu0 0.0
        %665 = vmatpush1.msra.mxu0 0.0
        %666 = vmatprep.subr.mxu0 0.0
        %667 = vmatpush1.msra.mxu0 0.0
        %668 = vmatprep.subr.mxu0 0.0
        %669 = vmatpush1.msra.mxu0 0.0
        %670 = vmatprep.subr.mxu0 0.0
        %671 = vmatpush1.msra.mxu0 0.0
        %672 = vmatprep.subr.mxu0 0.0
        %673 = vmatpush1.msra.mxu0 0.0
        %674 = vmatprep.subr.mxu0 0.0
        %675 = vmatpush1.msra.mxu0 0.0
        %676 = vmatprep.subr.mxu0 0.0
        %677 = vmatpush1.msra.mxu0 0.0
        %678 = vmatprep.subr.mxu0 0.0
        %679 = vmatpush1.msra.mxu0 0.0
        %680 = vmatprep.subr.mxu0 0.0
        %681 = vmatpush1.msra.mxu0 0.0
        %682 = vmatprep.subr.mxu0 0.0
        %683 = vmatpush1.msra.mxu0 0.0
        %684 = vmatprep.subr.mxu0 0.0
        %685 = vmatpush1.msra.mxu0 0.0
        %686 = vmatprep.subr.mxu0 0.0
        %687 = vmatpush1.msra.mxu0 0.0
        %688 = vmatprep.subr.mxu0 0.0
        %689 = vmatpush1.msra.mxu0 0.0
        %690 = vmatprep.subr.mxu0 0.0
        %691 = vmatpush1.msra.mxu0 0.0
        %692 = vmatprep.subr.mxu0 0.0
        %693 = vmatpush1.msra.mxu0 0.0
        %694 = vmatprep.subr.mxu0 0.0
        %695 = vmatpush1.msra.mxu0 0.0
        %696 = vmatprep.subr.mxu0 0.0
        %697 = vmatpush1.msra.mxu0 0.0
        %698 = vmatprep.subr.mxu0 0.0
        %699 = vmatpush1.msra.mxu0 0.0
        %700 = vmatprep.subr.mxu0 0.0
        %701 = vmatpush1.msra.mxu0 0.0
        %702 = vmatprep.subr.mxu0 0.0
        %703 = vmatpush1.msra.mxu0 0.0
        %704 = vmatprep.subr.mxu0 0.0
        %705 = vmatpush1.msra.mxu0 0.0
        %706 = vmatprep.subr.mxu0 0.0
        %707 = vmatpush1.msra.mxu0 0.0
        %708 = vmatprep.subr.mxu0 0.0
        %709 = vmatpush1.msra.mxu0 0.0
        %710 = vmatprep.subr.mxu0 0.0
        %711 = vmatpush1.msra.mxu0 0.0
        %712 = vmatprep.subr.mxu0 0.0
        %713 = vmatpush1.msra.mxu0 0.0
        %714 = vmatprep.subr.mxu0 0.0
        %715 = vmatpush1.msra.mxu0 0.0
        %716 = vmatprep.subr.mxu0 0.0
        %717 = vmatpush1.msra.mxu0 0.0
        %718 = vmatprep.subr.mxu0 0.0
        %719 = vmatpush1.msra.mxu0 0.0
        %720 = vmatprep.subr.mxu0 0.0
        %721 = vmatpush1.msra.mxu0 0.0
        %722 = vmatprep.subr.mxu0 0.0
        %723 = vmatpush1.msra.mxu0 0.0
        %724 = vmatprep.mubr.f32.mxu0 0.0
        %725 = vmatmul.mubr.f32.gmra.mrb[0].mxu0 %v572
        %v726 = vpop.f32.mrb[0].mxu0
        %v727 = vadd.f32 0.0, %v726
        %v728 = vpop.f32.mrb[0].mxu0
        %729 = vmatprep.mubr.f32.mxu0 0.0
        %730 = vmatmul.mubr.f32.gmra.mrb[0].mxu0 %v575
        %v731 = vpop.f32.mrb[0].mxu0
        %v732 = vadd.f32 0.0, %v731
        %v733 = vpop.f32.mrb[0].mxu0
        %734 = vdwg.mxu0
        %v735 = vadd.f32 %v471, %v650
        %v736 = vadd.f32 %v473, %v652
        %v737 = vadd.f32 %v548, %v727
        %v738 = vadd.f32 %v477, %v656
        %v739 = vadd.f32 %v479, %v658
        %v740 = vadd.f32 %v553, %v732
        %s741 = scalar_lea.vmem %s202, 48
        %v742 = vld [vmem:[%s741] sm:$0xff]
        %v743 = vld [vmem:[%s741 + $0x8] sm:$0xff]
        %744 = vrot.lane.b32.xlu0 %v203, 103
        %v745 = vpop.permute.xlu0 %744
        %746 = vrot.lane.b32.xlu0 %v212, 103
        %v747 = vpop.permute.xlu0 %746
        %748 = vrot.lane.b32.xlu0 %v204, 103
        %v749 = vpop.permute.xlu0 %748
        %750 = vrot.lane.b32.xlu0 %v213, 103
        %v751 = vpop.permute.xlu0 %750
        %vm752 = vcmask 842752
        %v753 = vsel %vm752, %v745, %v747
        %v754 = vsel %vm752, %v747, %v749
        %v755 = vsel %vm752, %v749, %v751
        %v757 = vsel %vm226, %v742, 0
        %v760 = vsel %vm226, %v743, 0
        %v762 = vsel %vm233, %v753, 0
        %v764 = vsel %vm233, %v754, 0
        %v766 = vsel %vm233, %v755, 0
        %768 = vmatprep.subr.mxu0 %v764
        %769 = vmatpush1.msra.mxu0 %v762
        %770 = vmatprep.subr.mxu0 0.0
        %771 = vmatpush1.msra.mxu0 0.0
        %772 = vmatprep.subr.mxu0 0.0
        %773 = vmatpush1.msra.mxu0 0.0
        %774 = vmatprep.subr.mxu0 0.0
        %775 = vmatpush1.msra.mxu0 0.0
        %776 = vmatprep.subr.mxu0 0.0
        %777 = vmatpush1.msra.mxu0 0.0
        %778 = vmatprep.subr.mxu0 0.0
        %779 = vmatpush1.msra.mxu0 0.0
        %780 = vmatprep.subr.mxu0 0.0
        %781 = vmatpush1.msra.mxu0 0.0
        %782 = vmatprep.subr.mxu0 0.0
        %783 = vmatpush1.msra.mxu0 0.0
        %784 = vmatprep.subr.mxu0 0.0
        %785 = vmatpush1.msra.mxu0 0.0
        %786 = vmatprep.subr.mxu0 0.0
        %787 = vmatpush1.msra.mxu0 0.0
        %788 = vmatprep.subr.mxu0 0.0
        %789 = vmatpush1.msra.mxu0 0.0
        %790 = vmatprep.subr.mxu0 0.0
        %791 = vmatpush1.msra.mxu0 0.0
        %792 = vmatprep.subr.mxu0 0.0
        %793 = vmatpush1.msra.mxu0 0.0
        %794 = vmatprep.subr.mxu0 0.0
        %795 = vmatpush1.msra.mxu0 0.0
        %796 = vmatprep.subr.mxu0 0.0
        %797 = vmatpush1.msra.mxu0 0.0
        %798 = vmatprep.subr.mxu0 0.0
        %799 = vmatpush1.msra.mxu0 0.0
        %800 = vmatprep.subr.mxu0 0.0
        %801 = vmatpush1.msra.mxu0 0.0
        %802 = vmatprep.subr.mxu0 0.0
        %803 = vmatpush1.msra.mxu0 0.0
        %804 = vmatprep.subr.mxu0 0.0
        %805 = vmatpush1.msra.mxu0 0.0
        %806 = vmatprep.subr.mxu0 0.0
        %807 = vmatpush1.msra.mxu0 0.0
        %808 = vmatprep.subr.mxu0 0.0
        %809 = vmatpush1.msra.mxu0 0.0
        %810 = vmatprep.subr.mxu0 0.0
        %811 = vmatpush1.msra.mxu0 0.0
        %812 = vmatprep.subr.mxu0 0.0
        %813 = vmatpush1.msra.mxu0 0.0
        %814 = vmatprep.subr.mxu0 0.0
        %815 = vmatpush1.msra.mxu0 0.0
        %816 = vmatprep.subr.mxu0 0.0
        %817 = vmatpush1.msra.mxu0 0.0
        %818 = vmatprep.subr.mxu0 0.0
        %819 = vmatpush1.msra.mxu0 0.0
        %820 = vmatprep.subr.mxu0 0.0
        %821 = vmatpush1.msra.mxu0 0.0
        %822 = vmatprep.subr.mxu0 0.0
        %823 = vmatpush1.msra.mxu0 0.0
        %824 = vmatprep.subr.mxu0 0.0
        %825 = vmatpush1.msra.mxu0 0.0
        %826 = vmatprep.subr.mxu0 0.0
        %827 = vmatpush1.msra.mxu0 0.0
        %828 = vmatprep.subr.mxu0 0.0
        %829 = vmatpush1.msra.mxu0 0.0
        %830 = vmatprep.subr.mxu0 0.0
        %831 = vmatpush1.msra.mxu0 0.0
        %832 = vmatprep.mubr.f32.mxu0 0.0
        %833 = vmatmul.mubr.f32.gmra.mrb[0].mxu0 %v757
        %v834 = vpop.f32.mrb[0].mxu0
        %v835 = vadd.f32 0.0, %v834
        %v836 = vpop.f32.mrb[0].mxu0
        %v837 = vadd.f32 0.0, %v836
        %838 = vmatprep.mubr.f32.mxu0 0.0
        %839 = vmatmul.mubr.f32.gmra.mrb[0].mxu0 %v760
        %v840 = vpop.f32.mrb[0].mxu0
        %v841 = vadd.f32 0.0, %v840
        %v842 = vpop.f32.mrb[0].mxu0
        %v843 = vadd.f32 0.0, %v842
        %844 = vdwg.mxu0
        %845 = vmatprep.subr.mxu0 0.0
        %846 = vmatpush1.msra.mxu0 %v766
        %847 = vmatprep.subr.mxu0 0.0
        %848 = vmatpush1.msra.mxu0 0.0
        %849 = vmatprep.subr.mxu0 0.0
        %850 = vmatpush1.msra.mxu0 0.0
        %851 = vmatprep.subr.mxu0 0.0
        %852 = vmatpush1.msra.mxu0 0.0
        %853 = vmatprep.subr.mxu0 0.0
        %854 = vmatpush1.msra.mxu0 0.0
        %855 = vmatprep.subr.mxu0 0.0
        %856 = vmatpush1.msra.mxu0 0.0
        %857 = vmatprep.subr.mxu0 0.0
        %858 = vmatpush1.msra.mxu0 0.0
        %859 = vmatprep.subr.mxu0 0.0
        %860 = vmatpush1.msra.mxu0 0.0
        %861 = vmatprep.subr.mxu0 0.0
        %862 = vmatpush1.msra.mxu0 0.0
        %863 = vmatprep.subr.mxu0 0.0
        %864 = vmatpush1.msra.mxu0 0.0
        %865 = vmatprep.subr.mxu0 0.0
        %866 = vmatpush1.msra.mxu0 0.0
        %867 = vmatprep.subr.mxu0 0.0
        %868 = vmatpush1.msra.mxu0 0.0
        %869 = vmatprep.subr.mxu0 0.0
        %870 = vmatpush1.msra.mxu0 0.0
        %871 = vmatprep.subr.mxu0 0.0
        %872 = vmatpush1.msra.mxu0 0.0
        %873 = vmatprep.subr.mxu0 0.0
        %874 = vmatpush1.msra.mxu0 0.0
        %875 = vmatprep.subr.mxu0 0.0
        %876 = vmatpush1.msra.mxu0 0.0
        %877 = vmatprep.subr.mxu0 0.0
        %878 = vmatpush1.msra.mxu0 0.0
        %879 = vmatprep.subr.mxu0 0.0
        %880 = vmatpush1.msra.mxu0 0.0
        %881 = vmatprep.subr.mxu0 0.0
        %882 = vmatpush1.msra.mxu0 0.0
        %883 = vmatprep.subr.mxu0 0.0
        %884 = vmatpush1.msra.mxu0 0.0
        %885 = vmatprep.subr.mxu0 0.0
        %886 = vmatpush1.msra.mxu0 0.0
        %887 = vmatprep.subr.mxu0 0.0
        %888 = vmatpush1.msra.mxu0 0.0
        %889 = vmatprep.subr.mxu0 0.0
        %890 = vmatpush1.msra.mxu0 0.0
        %891 = vmatprep.subr.mxu0 0.0
        %892 = vmatpush1.msra.mxu0 0.0
        %893 = vmatprep.subr.mxu0 0.0
        %894 = vmatpush1.msra.mxu0 0.0
        %895 = vmatprep.subr.mxu0 0.0
        %896 = vmatpush1.msra.mxu0 0.0
        %897 = vmatprep.subr.mxu0 0.0
        %898 = vmatpush1.msra.mxu0 0.0
        %899 = vmatprep.subr.mxu0 0.0
        %900 = vmatpush1.msra.mxu0 0.0
        %901 = vmatprep.subr.mxu0 0.0
        %902 = vmatpush1.msra.mxu0 0.0
        %903 = vmatprep.subr.mxu0 0.0
        %904 = vmatpush1.msra.mxu0 0.0
        %905 = vmatprep.subr.mxu0 0.0
        %906 = vmatpush1.msra.mxu0 0.0
        %907 = vmatprep.subr.mxu0 0.0
        %908 = vmatpush1.msra.mxu0 0.0
        %909 = vmatprep.mubr.f32.mxu0 0.0
        %910 = vmatmul.mubr.f32.gmra.mrb[0].mxu0 %v757
        %v911 = vpop.f32.mrb[0].mxu0
        %v912 = vadd.f32 0.0, %v911
        %v913 = vpop.f32.mrb[0].mxu0
        %914 = vmatprep.mubr.f32.mxu0 0.0
        %915 = vmatmul.mubr.f32.gmra.mrb[0].mxu0 %v760
        %v916 = vpop.f32.mrb[0].mxu0
        %v917 = vadd.f32 0.0, %v916
        %v918 = vpop.f32.mrb[0].mxu0
        %919 = vdwg.mxu0
        %v920 = vadd.f32 %v735, %v835
        %v921 = vadd.f32 %v736, %v837
        %v922 = vadd.f32 %v737, %v912
        %v923 = vadd.f32 %v738, %v841
        %v924 = vadd.f32 %v739, %v843
        %v925 = vadd.f32 %v740, %v917
        %v926 = vld [vmem:[%s2] sm:$0xff]
        %v927 = vld [vmem:[%s2 + $0x8] sm:$0xff]
        %929 = vset.pattern.permute.xlu0 0
        %930 = vperm.xlu0 %929, %v926
        %v931 = vpop.permute.xlu0 %930
        %934 = vset.pattern.permute.xlu0 0
        %935 = vperm.xlu0 %934, %v927
        %v936 = vpop.permute.xlu0 %935
        %v938 = vadd.f32 %v920, %v931
        %v939 = vadd.f32 %v921, %v931
        %v940 = vadd.f32 %v922, %v931
        %v941 = vadd.f32 %v923, %v936
        %v942 = vadd.f32 %v924, %v936
        %v943 = vadd.f32 %v925, %v936
        %v944 = vxor.u32 %v941, 2147483648
        %v945 = vxor.u32 %v942, 2147483648
        %v946 = vxor.u32 %v943, 2147483648
        %v947 = vmul.f32 %v944, 1.442695
        %v948 = vpow.pop %v947
        %v949 = vmul.f32 %v945, 1.442695
        %v950 = vpow.pop %v949
        %v951 = vmul.f32 %v946, 1.442695
        %v952 = vpow.pop %v951
        %v953 = vadd.f32 %v948, 1.0
        %v954 = vadd.f32 %v950, 1.0
        %v955 = vadd.f32 %v952, 1.0
        %v956 = vrcp.pop %v953
        %v957 = vmul.f32 1.0, %v956
        %v958 = vrcp.pop %v954
        %v959 = vmul.f32 1.0, %v958
        %v960 = vrcp.pop %v955
        %v961 = vmul.f32 1.0, %v960
        %v962 = vmul.f32 %v938, %v957
        %v963 = vmul.f32 %v939, %v959
        %v964 = vmul.f32 %v940, %v961
        %965 = vst [vmem:[%s192] sm:$0xff] %v962
        %966 = vst [vmem:[%s192 + $0x8] sm:$0xff] %v963
        %967 = vst [vmem:[%s192 + $0x10] sm:$0xff] %v964
        %s968 = sand.u32 %s112, 1
        %s969 = scalar_lea.sflag [#allocation3], %s968
        %s970 = sand.u32 %s112, 1
        %s971 = smul.addr %s970, 24
        %s972 = scalar_lea.vmem [#allocation2], %s971
        // Predicated region
        $region33: #{tpu_custom_call.1} parent=31 // pred_check
          %p973 = pneg %p122
        $region34: #{tpu_custom_call.1} parent=31 // pred_check_branch
          %975 = sbr.rel (%p973) target = $region36
        $region35: #{tpu_custom_call.1} parent=31 // pred_region
          %s977 = ssub.s32 384, 384
          %978 = vsyncadd %s969, %s977
          %s979 = smul.addr %s22, 3
          %s980 = smul.addr %s21, 12
          %s981 = sadd.s32 %s979, %s980
          %s982 = smul.addr %s981, 128
          %s983 = scalar_lea.hbm %s3, %s982
          %s985 = sshll.u32 %s972, 4
          %s986 = int_to_ptr.vmem [resolvable:$true] %s985
          %988 = dma.vmem_to_hbm [thread:$0]  %s986, 384, %s983, %s969
        $region36: #{tpu_custom_call.1} parent=31 // pred_fallthru
          _
      $region32: #{tpu_custom_call.1} parent=5 // pred_fallthru
        _
      %p989 = scmp.le.s32.totalorder 2, %s12
      // Predicated region
      $region37: #{tpu_custom_call.1} parent=5 // pred_check
        %p990 = pneg %p989
      $region38: #{tpu_custom_call.1} parent=5 // pred_check_branch
        %992 = sbr.rel (%p990) target = $region40
      $region39: #{tpu_custom_call.1} parent=5 // pred_region
        %s993 = ssub.s32 %s12, 2
        // Predicated region
        $region41: #{tpu_custom_call.1} parent=39 // pred_check
          %p994 = pneg %p128
        $region42: #{tpu_custom_call.1} parent=39 // pred_check_branch
          %996 = sbr.rel (%p994) target = $region44
        $region43: #{tpu_custom_call.1} parent=39 // pred_region
          %s997 = sand.u32 %s113, 1
          %s998 = scalar_lea.sflag [#allocation3], %s997
          %s999 = sand.u32 %s113, 1
          %s1000 = smul.addr %s999, 24
          %s1001 = scalar_lea.vmem [#allocation2], %s1000
          %1002 = dma.done %s998, 384
        $region44: #{tpu_custom_call.1} parent=39 // pred_fallthru
          _
      $region40: #{tpu_custom_call.1} parent=5 // pred_fallthru
        _
    $region6: #{tpu_custom_call.1} parent=1 // loop_footer
      %s16 = sadd.s32 1, %s12
    $region7: #{tpu_custom_call.1} parent=1 // loop_footer_branch
      %11 = sbr.rel target = $region3
    $region8: #{tpu_custom_call.1} parent=1 // loop_exit
      _
    %1003 = vsyncpa [#allocation3], 1
    %s1004 = scalar_lea.sflag [#allocation3], 1
    %1005 = vsyncpa %s1004, 1

</llo_original>
